<compile_context>
chip_gen: v6e
topology: v6e:2x2x1
jax: 0.10.0
libtpu: 0.0.40
codegen_flags: <defaults>
</compile_context>

<pallas_src>
import numpy as np
import jax
import jax.numpy as jnp
from jax.experimental import pallas as pl
from jax.experimental.pallas import tpu as pltpu


def create_high_pass_kernel(kernel_size: int, sigma: float, in_channels: int) -> np.ndarray:
    """Deterministic re-implementation of GaussianFilter.create_high_pass_kernel -> (C,1,K,K) f32."""
    kernel = np.zeros((kernel_size, kernel_size), dtype=np.float64)
    pad = kernel_size // 2
    for x in range(-pad, -pad + kernel_size):
        for y in range(-pad, -pad + kernel_size):
            kernel[y + pad, x + pad] = np.exp(-(x ** 2 + y ** 2) / (2.0 * sigma ** 2))
    kernel /= sigma ** 2 * np.pi * 2.0
    kernel /= kernel.sum()
    identity_kernel = np.zeros((kernel_size, kernel_size), dtype=np.float64)
    identity_kernel[pad, pad] = 1.0
    high_pass_kernel = identity_kernel - kernel
    high_pass_kernel /= -high_pass_kernel[pad, pad]
    hp = high_pass_kernel.astype(np.float32)                       # (K, K)
    # torch: unsqueeze(0).unsqueeze(0).repeat(C,1,1,1) -> (C, 1, K, K)
    return np.tile(hp[None, None, :, :], (in_channels, 1, 1, 1))


def _tap_shifts(K: int, H: int, W: int):
    """Static lane-roll amount per tap so rolled[f] == x_flat[(f + di*W + dj) mod H*W]."""
    p = K // 2
    HW = H * W
    return tuple((-((i - p) * W + (j - p))) % HW for i in range(K) for j in range(K))


def _fused_tap_weights(filt: np.ndarray, K: int, H: int, W: int) -> np.ndarray:
    """(K,K) filter -> (K*K, 1, H*W) f32 constant: tap weight x zero-padding border mask."""
    p = K // 2
    rr = np.arange(H)[:, None]
    cc = np.arange(W)[None, :]
    taps = []
    for i in range(K):
        for j in range(K):
            di, dj = i - p, j - p
            m = ((rr + di >= 0) & (rr + di < H) & (cc + dj >= 0) & (cc + dj < W))
            taps.append((float(filt[i, j]) * m.astype(np.float32)).reshape(1, H * W))
    return np.stack(taps, axis=0).astype(np.float32)               # (K*K, 1, H*W)


def _choose_row_block(R: int, HW: int, itemsize: int, target_bytes: int = 1 << 20) -> int:
    """Largest row tile that is a multiple of 8, divides R, and is ~target_bytes; else full R."""
    if R % 8 != 0 or R * HW * itemsize <= target_bytes:
        return R
    rb = max(8, (target_bytes // (HW * itemsize)) // 8 * 8)
    rb = min(rb, R)
    while R % rb != 0:
        rb -= 8
    return rb


def _dwconv_kernel_factory(shifts):
    def kernel(x_ref, wm_ref, o_ref):
        # x_ref : (Rb, HW)       folded (batch*channel) planes, each flattened to H*W lanes
        # wm_ref: (K*K, 1, HW)   fused (tap weight x border mask) constant, fetched once
        # o_ref : (Rb, HW)
        x = x_ref[...].astype(jnp.float32)
        acc = jnp.zeros(x.shape, jnp.float32)
        for t, s in enumerate(shifts):                             # static, unrolled K*K taps
            shifted = x if s == 0 else pltpu.roll(x, s, axis=1)    # XLU lane rotate
            acc = acc + wm_ref[t] * shifted                        # one fused VPU mul+add per tap
        o_ref[...] = acc.astype(o_ref.dtype)
    return kernel


class GaussianFilterPallas:
    """Pallas-TPU equivalent of the PyTorch GaussianFilter module (forward pass only)."""

    def __init__(self, kernel_size: int, sigma: float, in_channels: int = 3):
        assert kernel_size % 2 == 1, "GaussianFilter assumes an odd kernel_size"
        self.kernel_size = kernel_size
        self.sigma = sigma
        self.in_channels = in_channels
        self.kernel = create_high_pass_kernel(kernel_size, sigma, in_channels)   # (C,1,K,K) np
        self._fwd_cache = {}

    def _build_forward(self, N, C, H, W, dtype):
        K = self.kernel_size
        HW = H * W
        R = N * C
        KK = K * K
        itemsize = jnp.dtype(dtype).itemsize

        # GaussianFilter tiles one identical (K,K) filter across all channels; using the shared
        # copy makes the fused constant channel-independent (C-times smaller in HBM/VMEM).
        filt = self.kernel[0, 0]
        assert np.allclose(self.kernel, filt[None, None]), "per-channel filters not supported"
        # TODO(synk): support non-identical per-channel depthwise weights ((K*K, C, HW) constant).

        wm = jnp.asarray(_fused_tap_weights(filt, K, H, W))        # (K*K, 1, HW), built once
        shifts = _tap_shifts(K, H, W)

        rb = _choose_row_block(R, HW, itemsize)                    # multiple of 8 (or full R)
        grid = (R // rb,)
        block_bytes = rb * HW * itemsize
        # 2x double-buffered (in + out) blocks + double-buffered constant + generous headroom.
        vmem_limit = int(min(4 * block_bytes + 2 * KK * HW * 4 + (4 << 20), 32 << 20))

        call = pl.pallas_call(
            _dwconv_kernel_factory(shifts),
            out_shape=jax.ShapeDtypeStruct((R, HW), dtype),
            grid_spec=pltpu.PrefetchScalarGridSpec(
                num_scalar_prefetch=0,
                grid=grid,
                in_specs=[
                    pl.BlockSpec((rb, HW), lambda r: (r, 0)),
                    # constant block index -> fetched once, never re-DMA'd across grid steps
                    pl.BlockSpec((KK, 1, HW), lambda r: (0, 0, 0)),
                ],
                out_specs=pl.BlockSpec((rb, HW), lambda r: (r, 0)),
            ),
            compiler_params=pltpu.CompilerParams(
                dimension_semantics=("parallel",),     # row tiles independent (megacore / 2 TCs)
                vmem_limit_bytes=vmem_limit,
            ),
        )

        def forward(x):
            out = call(x.reshape(R, HW), wm)           # free, layout-preserving reshape
            return out.reshape(N, C, H, W)

        return jax.jit(forward)

    def __call__(self, x):
        N, C, H, W = x.shape
        assert C == self.in_channels
        key = (N, C, H, W, jnp.dtype(x.dtype).name)
        fwd = self._fwd_cache.get(key)
        if fwd is None:
            fwd = self._build_forward(N, C, H, W, x.dtype)
            self._fwd_cache[key] = fwd
        return fwd(x)


def _reference_forward_np(x, weight, kernel_size):
    """Direct numpy reference of F.conv2d(x, weight, padding=K//2, groups=C) (cross-correlation)."""
    x = np.asarray(x, dtype=np.float32)
    w = np.asarray(weight, dtype=np.float32)
    N, C, H, W = x.shape
    K = kernel_size
    p = K // 2
    xp = np.pad(x, ((0, 0), (0, 0), (p, p), (p, p)))
    out = np.zeros_like(x)
    for i in range(K):
        for j in range(K):
            wij = w[:, 0, i, j].reshape(1, C, 1, 1)
            out += wij * xp[:, :, i:i + H, j:j + W]
    return out


if __name__ == "__main__":
    kernel_size = 3
    sigma = 1.0
    in_channels = 4          # N*C = 8 -> full sublane occupancy in the demo

    N, H, W = 2, 16, 16
    mod = GaussianFilterPallas(kernel_size, sigma, in_channels)

    key = jax.random.PRNGKey(0)
    x = jax.random.normal(key, (N, in_channels, H, W), dtype=jnp.float32)

    out = mod(x)
    out = jax.block_until_ready(out)

    ref = _reference_forward_np(x, mod.kernel, kernel_size)
    assert out.shape == (N, in_channels, H, W)
    np.testing.assert_allclose(np.asarray(out), ref, rtol=1e-5, atol=1e-5)

    print("KERNEL_OK")
</pallas_src>

<mosaic_0001>
module attributes {stable_mosaic.version = 11 : i64} {
  func.func @kernel(%arg0: i32, %arg1: memref<8x256xf32, #tpu.memory_space<vmem>>, %arg2: memref<9x1x256xf32, #tpu.memory_space<vmem>>, %arg3: memref<8x256xf32, #tpu.memory_space<vmem>>) attributes {dimension_semantics = [#tpu.dimension_semantics<parallel>], iteration_bounds = array<i64: 1>, scalar_prefetch = 0 : i64, scratch_operands = 0 : i64, tpu.core_type = #tpu.core_type<tc>, window_params = [{transform_indices = @transform_0, window_bounds = array<i64: 8, 256>}, {pipeline_mode = #tpu.pipeline_mode<synchronous>, transform_indices = @transform_1, window_bounds = array<i64: 9, 1, 256>}, {transform_indices = @transform_2, window_bounds = array<i64: 8, 256>}]} {
    %c0 = arith.constant 0 : index
    %c0_0 = arith.constant 0 : index
    %0 = vector.load %arg1[%c0, %c0_0] : memref<8x256xf32, #tpu.memory_space<vmem>>, vector<8x256xf32>
    %cst = arith.constant 0.000000e+00 : f32
    %1 = vector.broadcast %cst : f32 to vector<8x256xf32>
    %c17_i32 = arith.constant 17 : i32
    %2 = tpu.dynamic_rotate %0 by %c17_i32 dim 1 : vector<8x256xf32>, i32 -> vector<8x256xf32>
    %c0_1 = arith.constant 0 : index
    %c0_2 = arith.constant 0 : index
    %c0_3 = arith.constant 0 : index
    %3 = vector.load %arg2[%c0_1, %c0_2, %c0_3] : memref<9x1x256xf32, #tpu.memory_space<vmem>>, vector<1x1x256xf32>
    %4 = vector.shape_cast %3 : vector<1x1x256xf32> to vector<1x256xf32>
    %5 = vector.broadcast %4 : vector<1x256xf32> to vector<8x256xf32>
    %6 = arith.mulf %5, %2 : vector<8x256xf32>
    %7 = arith.addf %1, %6 : vector<8x256xf32>
    %c16_i32 = arith.constant 16 : i32
    %8 = tpu.dynamic_rotate %0 by %c16_i32 dim 1 : vector<8x256xf32>, i32 -> vector<8x256xf32>
    %c1 = arith.constant 1 : index
    %c0_4 = arith.constant 0 : index
    %c0_5 = arith.constant 0 : index
    %9 = vector.load %arg2[%c1, %c0_4, %c0_5] : memref<9x1x256xf32, #tpu.memory_space<vmem>>, vector<1x1x256xf32>
    %10 = vector.shape_cast %9 : vector<1x1x256xf32> to vector<1x256xf32>
    %11 = vector.broadcast %10 : vector<1x256xf32> to vector<8x256xf32>
    %12 = arith.mulf %11, %8 : vector<8x256xf32>
    %13 = arith.addf %7, %12 : vector<8x256xf32>
    %c15_i32 = arith.constant 15 : i32
    %14 = tpu.dynamic_rotate %0 by %c15_i32 dim 1 : vector<8x256xf32>, i32 -> vector<8x256xf32>
    %c2 = arith.constant 2 : index
    %c0_6 = arith.constant 0 : index
    %c0_7 = arith.constant 0 : index
    %15 = vector.load %arg2[%c2, %c0_6, %c0_7] : memref<9x1x256xf32, #tpu.memory_space<vmem>>, vector<1x1x256xf32>
    %16 = vector.shape_cast %15 : vector<1x1x256xf32> to vector<1x256xf32>
    %17 = vector.broadcast %16 : vector<1x256xf32> to vector<8x256xf32>
    %18 = arith.mulf %17, %14 : vector<8x256xf32>
    %19 = arith.addf %13, %18 : vector<8x256xf32>
    %c1_i32 = arith.constant 1 : i32
    %20 = tpu.dynamic_rotate %0 by %c1_i32 dim 1 : vector<8x256xf32>, i32 -> vector<8x256xf32>
    %c3 = arith.constant 3 : index
    %c0_8 = arith.constant 0 : index
    %c0_9 = arith.constant 0 : index
    %21 = vector.load %arg2[%c3, %c0_8, %c0_9] : memref<9x1x256xf32, #tpu.memory_space<vmem>>, vector<1x1x256xf32>
    %22 = vector.shape_cast %21 : vector<1x1x256xf32> to vector<1x256xf32>
    %23 = vector.broadcast %22 : vector<1x256xf32> to vector<8x256xf32>
    %24 = arith.mulf %23, %20 : vector<8x256xf32>
    %25 = arith.addf %19, %24 : vector<8x256xf32>
    %c4 = arith.constant 4 : index
    %c0_10 = arith.constant 0 : index
    %c0_11 = arith.constant 0 : index
    %26 = vector.load %arg2[%c4, %c0_10, %c0_11] : memref<9x1x256xf32, #tpu.memory_space<vmem>>, vector<1x1x256xf32>
    %27 = vector.shape_cast %26 : vector<1x1x256xf32> to vector<1x256xf32>
    %28 = vector.broadcast %27 : vector<1x256xf32> to vector<8x256xf32>
    %29 = arith.mulf %28, %0 : vector<8x256xf32>
    %30 = arith.addf %25, %29 : vector<8x256xf32>
    %c255_i32 = arith.constant 255 : i32
    %31 = tpu.dynamic_rotate %0 by %c255_i32 dim 1 : vector<8x256xf32>, i32 -> vector<8x256xf32>
    %c5 = arith.constant 5 : index
    %c0_12 = arith.constant 0 : index
    %c0_13 = arith.constant 0 : index
    %32 = vector.load %arg2[%c5, %c0_12, %c0_13] : memref<9x1x256xf32, #tpu.memory_space<vmem>>, vector<1x1x256xf32>
    %33 = vector.shape_cast %32 : vector<1x1x256xf32> to vector<1x256xf32>
    %34 = vector.broadcast %33 : vector<1x256xf32> to vector<8x256xf32>
    %35 = arith.mulf %34, %31 : vector<8x256xf32>
    %36 = arith.addf %30, %35 : vector<8x256xf32>
    %c241_i32 = arith.constant 241 : i32
    %37 = tpu.dynamic_rotate %0 by %c241_i32 dim 1 : vector<8x256xf32>, i32 -> vector<8x256xf32>
    %c6 = arith.constant 6 : index
    %c0_14 = arith.constant 0 : index
    %c0_15 = arith.constant 0 : index
    %38 = vector.load %arg2[%c6, %c0_14, %c0_15] : memref<9x1x256xf32, #tpu.memory_space<vmem>>, vector<1x1x256xf32>
    %39 = vector.shape_cast %38 : vector<1x1x256xf32> to vector<1x256xf32>
    %40 = vector.broadcast %39 : vector<1x256xf32> to vector<8x256xf32>
    %41 = arith.mulf %40, %37 : vector<8x256xf32>
    %42 = arith.addf %36, %41 : vector<8x256xf32>
    %c240_i32 = arith.constant 240 : i32
    %43 = tpu.dynamic_rotate %0 by %c240_i32 dim 1 : vector<8x256xf32>, i32 -> vector<8x256xf32>
    %c7 = arith.constant 7 : index
    %c0_16 = arith.constant 0 : index
    %c0_17 = arith.constant 0 : index
    %44 = vector.load %arg2[%c7, %c0_16, %c0_17] : memref<9x1x256xf32, #tpu.memory_space<vmem>>, vector<1x1x256xf32>
    %45 = vector.shape_cast %44 : vector<1x1x256xf32> to vector<1x256xf32>
    %46 = vector.broadcast %45 : vector<1x256xf32> to vector<8x256xf32>
    %47 = arith.mulf %46, %43 : vector<8x256xf32>
    %48 = arith.addf %42, %47 : vector<8x256xf32>
    %c239_i32 = arith.constant 239 : i32
    %49 = tpu.dynamic_rotate %0 by %c239_i32 dim 1 : vector<8x256xf32>, i32 -> vector<8x256xf32>
    %c8 = arith.constant 8 : index
    %c0_18 = arith.constant 0 : index
    %c0_19 = arith.constant 0 : index
    %50 = vector.load %arg2[%c8, %c0_18, %c0_19] : memref<9x1x256xf32, #tpu.memory_space<vmem>>, vector<1x1x256xf32>
    %51 = vector.shape_cast %50 : vector<1x1x256xf32> to vector<1x256xf32>
    %52 = vector.broadcast %51 : vector<1x256xf32> to vector<8x256xf32>
    %53 = arith.mulf %52, %49 : vector<8x256xf32>
    %54 = arith.addf %48, %53 : vector<8x256xf32>
    %c0_20 = arith.constant 0 : index
    %c0_21 = arith.constant 0 : index
    %55 = vector.load %arg3[%c0_20, %c0_21] : memref<8x256xf32, #tpu.memory_space<vmem>>, vector<8x256xf32>
    tpu.vector_store %arg3[%c0_20, %c0_21], %54 {strides = array<i32>} : memref<8x256xf32, #tpu.memory_space<vmem>>, vector<8x256xf32>,
    return
  }
  func.func @transform_0(%arg0: i32) -> (i32, i32) {
    %c0_i32 = arith.constant 0 : i32
    %c0_i32_0 = arith.constant 0 : i32
    return %arg0, %c0_i32 : i32, i32
  }
  func.func @transform_1(%arg0: i32) -> (i32, i32, i32) {
    %c0_i32 = arith.constant 0 : i32
    %c0_i32_0 = arith.constant 0 : i32
    %c0_i32_1 = arith.constant 0 : i32
    %c0_i32_2 = arith.constant 0 : i32
    return %c0_i32, %c0_i32_0, %c0_i32_1 : i32, i32, i32
  }
  func.func @transform_2(%arg0: i32) -> (i32, i32) {
    %c0_i32 = arith.constant 0 : i32
    %c0_i32_0 = arith.constant 0 : i32
    return %arg0, %c0_i32 : i32, i32
  }
}

</mosaic_0001>

<llo_original>
// kernel: forward.1
$region0: #{forward.1}
  #allocation0 [shape = 'u32[]', space=smem, size = 0x4, offset = 0x4, fixed_abs, tag = 'smem constant byte address 0x4 - core index']
  #allocation1 [shape = 'u32[144,128]{1,0:T(1,128)}', space=vmem, size = 0x12000, scoped, tag = 'internal scratch']
  %s0 = inlined_call_operand.vmem [shape: f32[8,256], index: 0, kind: input, shape index: {}]
  %s1 = inlined_call_operand.vmem [shape: f32[9,1,256], index: 1, kind: input, shape index: {}]
  %s2 = inlined_call_operand.vmem [shape: f32[8,256], index: 2, kind: output, shape index: {}]
  %s3 = sld [smem:[#allocation0]]
  $region18: #{forward.1} parent=0
    _
  %s5 = ssub.s32 1, %s3
  %s6 = scalar_select 0, %s5, %s3
  // Predicated region
  $region2: #{forward.1} parent=0 // pred_check
    _
  $region3: #{forward.1} parent=0 // pred_check_branch
    %8 = sbr.rel (0) target = $region5
  $region4: #{forward.1} parent=0 // pred_region
    _
  $region5: #{forward.1} parent=0 // pred_fallthru
    _
  // Predicated region
  $region6: #{forward.1} parent=0 // pred_check
    _
  $region7: #{forward.1} parent=0 // pred_check_branch
    %10 = sbr.rel (0) target = $region9
  $region8: #{forward.1} parent=0 // pred_region
    _
  $region9: #{forward.1} parent=0 // pred_fallthru
    _
  %v11 = vld [vmem:[%s0] sm:$0xff]
  %v12 = vld [vmem:[%s0 + $0x8] sm:$0xff]
  %13 = vrot.lane.b32.xlu0 %v11, 17
  %v14 = vpop.permute.xlu0 %13
  %15 = vrot.lane.b32.xlu0 %v12, 17
  %v16 = vpop.permute.xlu0 %15
  %v17 = vlaneseq
  %v18 = vand.u32 %v17, 127
  %vm19 = vcmp.lt.s32.totalorder %v18, 17
  %v20 = vsel %vm19, %v14, %v16
  %v21 = vsel %vm19, %v16, %v14
  %v22 = vld [vmem:[%s1] sm:$0x3]
  %v24 = vlaneseq
  %v25 = vshrl.u32 %v24, 7
  %v26 = vsub.s32 0, %v25
  %v27 = vrot.slane %v22, %v26
  %v28 = vlaneseq
  %v29 = vshrl.u32 %v28, 7
  %v30 = vsub.s32 1, %v29
  %v31 = vrot.slane %v22, %v30
  %v34 = vmul.f32 %v27, %v21
  %v35 = vmul.f32 %v31, %v20
  %v36 = vadd.f32 %v34, 0.0
  %v37 = vadd.f32 %v35, 0.0
  %38 = vrot.lane.b32.xlu0 %v11, 16
  %v39 = vpop.permute.xlu0 %38
  %40 = vrot.lane.b32.xlu0 %v12, 16
  %v41 = vpop.permute.xlu0 %40
  %vm42 = vcmp.lt.s32.totalorder %v18, 16
  %v43 = vsel %vm42, %v39, %v41
  %v44 = vsel %vm42, %v41, %v39
  %s45 = scalar_lea.vmem %s1, 2
  %v46 = vld [vmem:[%s45] sm:$0x3]
  %v48 = vlaneseq
  %v49 = vshrl.u32 %v48, 7
  %v50 = vsub.s32 0, %v49
  %v51 = vrot.slane %v46, %v50
  %v52 = vlaneseq
  %v53 = vshrl.u32 %v52, 7
  %v54 = vsub.s32 1, %v53
  %v55 = vrot.slane %v46, %v54
  %v58 = vmul.f32 %v51, %v44
  %v59 = vmul.f32 %v55, %v43
  %v60 = vadd.f32 %v36, %v58
  %v61 = vadd.f32 %v37, %v59
  %62 = vrot.lane.b32.xlu0 %v11, 15
  %v63 = vpop.permute.xlu0 %62
  %64 = vrot.lane.b32.xlu0 %v12, 15
  %v65 = vpop.permute.xlu0 %64
  %vm66 = vcmp.lt.s32.totalorder %v18, 15
  %v67 = vsel %vm66, %v63, %v65
  %v68 = vsel %vm66, %v65, %v63
  %s69 = scalar_lea.vmem %s1, 4
  %v70 = vld [vmem:[%s69] sm:$0x3]
  %v72 = vlaneseq
  %v73 = vshrl.u32 %v72, 7
  %v74 = vsub.s32 0, %v73
  %v75 = vrot.slane %v70, %v74
  %v76 = vlaneseq
  %v77 = vshrl.u32 %v76, 7
  %v78 = vsub.s32 1, %v77
  %v79 = vrot.slane %v70, %v78
  %v82 = vmul.f32 %v75, %v68
  %v83 = vmul.f32 %v79, %v67
  %v84 = vadd.f32 %v60, %v82
  %v85 = vadd.f32 %v61, %v83
  %86 = vrot.lane.b32.xlu0 %v11, 1
  %v87 = vpop.permute.xlu0 %86
  %88 = vrot.lane.b32.xlu0 %v12, 1
  %v89 = vpop.permute.xlu0 %88
  %vm90 = vcmp.lt.s32.totalorder %v18, 1
  %v91 = vsel %vm90, %v87, %v89
  %v92 = vsel %vm90, %v89, %v87
  %s93 = scalar_lea.vmem %s1, 6
  %v94 = vld [vmem:[%s93] sm:$0x3]
  %v96 = vlaneseq
  %v97 = vshrl.u32 %v96, 7
  %v98 = vsub.s32 0, %v97
  %v99 = vrot.slane %v94, %v98
  %v100 = vlaneseq
  %v101 = vshrl.u32 %v100, 7
  %v102 = vsub.s32 1, %v101
  %v103 = vrot.slane %v94, %v102
  %v106 = vmul.f32 %v99, %v92
  %v107 = vmul.f32 %v103, %v91
  %v108 = vadd.f32 %v84, %v106
  %v109 = vadd.f32 %v85, %v107
  %s110 = scalar_lea.vmem %s1, 8
  %v111 = vld [vmem:[%s110] sm:$0x3]
  %v113 = vlaneseq
  %v114 = vshrl.u32 %v113, 7
  %v115 = vsub.s32 0, %v114
  %v116 = vrot.slane %v111, %v115
  %v117 = vlaneseq
  %v118 = vshrl.u32 %v117, 7
  %v119 = vsub.s32 1, %v118
  %v120 = vrot.slane %v111, %v119
  %v123 = vmul.f32 %v116, %v11
  %v124 = vmul.f32 %v120, %v12
  %v125 = vadd.f32 %v108, %v123
  %v126 = vadd.f32 %v109, %v124
  %127 = vrot.lane.b32.xlu0 %v11, 127
  %v128 = vpop.permute.xlu0 %127
  %129 = vrot.lane.b32.xlu0 %v12, 127
  %v130 = vpop.permute.xlu0 %129
  %vm131 = vcmp.lt.s32.totalorder %v18, 127
  %v132 = vsel %vm131, %v128, %v130
  %v133 = vsel %vm131, %v130, %v128
  %s134 = scalar_lea.vmem %s1, 10
  %v135 = vld [vmem:[%s134] sm:$0x3]
  %v137 = vlaneseq
  %v138 = vshrl.u32 %v137, 7
  %v139 = vsub.s32 0, %v138
  %v140 = vrot.slane %v135, %v139
  %v141 = vlaneseq
  %v142 = vshrl.u32 %v141, 7
  %v143 = vsub.s32 1, %v142
  %v144 = vrot.slane %v135, %v143
  %v147 = vmul.f32 %v140, %v132
  %v148 = vmul.f32 %v144, %v133
  %v149 = vadd.f32 %v125, %v147
  %v150 = vadd.f32 %v126, %v148
  %151 = vrot.lane.b32.xlu0 %v11, 113
  %v152 = vpop.permute.xlu0 %151
  %153 = vrot.lane.b32.xlu0 %v12, 113
  %v154 = vpop.permute.xlu0 %153
  %vm155 = vcmp.lt.s32.totalorder %v18, 113
  %v156 = vsel %vm155, %v152, %v154
  %v157 = vsel %vm155, %v154, %v152
  %s158 = scalar_lea.vmem %s1, 12
  %v159 = vld [vmem:[%s158] sm:$0x3]
  %v161 = vlaneseq
  %v162 = vshrl.u32 %v161, 7
  %v163 = vsub.s32 0, %v162
  %v164 = vrot.slane %v159, %v163
  %v165 = vlaneseq
  %v166 = vshrl.u32 %v165, 7
  %v167 = vsub.s32 1, %v166
  %v168 = vrot.slane %v159, %v167
  %v171 = vmul.f32 %v164, %v156
  %v172 = vmul.f32 %v168, %v157
  %v173 = vadd.f32 %v149, %v171
  %v174 = vadd.f32 %v150, %v172
  %175 = vrot.lane.b32.xlu0 %v11, 112
  %v176 = vpop.permute.xlu0 %175
  %177 = vrot.lane.b32.xlu0 %v12, 112
  %v178 = vpop.permute.xlu0 %177
  %vm179 = vcmp.lt.s32.totalorder %v18, 112
  %v180 = vsel %vm179, %v176, %v178
  %v181 = vsel %vm179, %v178, %v176
  %s182 = scalar_lea.vmem %s1, 14
  %v183 = vld [vmem:[%s182] sm:$0x3]
  %v185 = vlaneseq
  %v186 = vshrl.u32 %v185, 7
  %v187 = vsub.s32 0, %v186
  %v188 = vrot.slane %v183, %v187
  %v189 = vlaneseq
  %v190 = vshrl.u32 %v189, 7
  %v191 = vsub.s32 1, %v190
  %v192 = vrot.slane %v183, %v191
  %v195 = vmul.f32 %v188, %v180
  %v196 = vmul.f32 %v192, %v181
  %v197 = vadd.f32 %v173, %v195
  %v198 = vadd.f32 %v174, %v196
  %199 = vrot.lane.b32.xlu0 %v11, 111
  %v200 = vpop.permute.xlu0 %199
  %201 = vrot.lane.b32.xlu0 %v12, 111
  %v202 = vpop.permute.xlu0 %201
  %vm203 = vcmp.lt.s32.totalorder %v18, 111
  %v204 = vsel %vm203, %v200, %v202
  %v205 = vsel %vm203, %v202, %v200
  %s206 = scalar_lea.vmem %s1, 16
  %v207 = vld [vmem:[%s206] sm:$0x3]
  %v209 = vlaneseq
  %v210 = vshrl.u32 %v209, 7
  %v211 = vsub.s32 0, %v210
  %v212 = vrot.slane %v207, %v211
  %v213 = vlaneseq
  %v214 = vshrl.u32 %v213, 7
  %v215 = vsub.s32 1, %v214
  %v216 = vrot.slane %v207, %v215
  %v219 = vmul.f32 %v212, %v204
  %v220 = vmul.f32 %v216, %v205
  %v221 = vadd.f32 %v197, %v219
  %v222 = vadd.f32 %v198, %v220
  %223 = vst [vmem:[%s2] sm:$0xff] %v221
  %224 = vst [vmem:[%s2 + $0x8] sm:$0xff] %v222
  // Predicated region
  $region10: #{forward.1} parent=0 // pred_check
    _
  $region11: #{forward.1} parent=0 // pred_check_branch
    %226 = sbr.rel (0) target = $region13
  $region12: #{forward.1} parent=0 // pred_region
    _
  $region13: #{forward.1} parent=0 // pred_fallthru
    _
  // Predicated region
  $region14: #{forward.1} parent=0 // pred_check
    _
  $region15: #{forward.1} parent=0 // pred_check_branch
    %228 = sbr.rel (0) target = $region17
  $region16: #{forward.1} parent=0 // pred_region
    _
  $region17: #{forward.1} parent=0 // pred_fallthru
    _

</llo_original>
